<compile_context>
chip_gen: v7x
topology: tpu7x:2x2x1
jax: 0.10.0
libtpu: 0.0.40
codegen_flags: <defaults>
</compile_context>

<pallas_src>
import functools

import jax
import jax.numpy as jnp
from jax.experimental import pallas as pl
from jax.experimental.pallas import tpu as pltpu

_LANES = 128
_SUBLANES = 8
_UNIT = _LANES * _SUBLANES  # 1024


def _dice_partial_kernel(pred_ref, target_ref, out_ref, *, block_rows):
    """Accumulate per-batch partial sums into a (3, 8, 128) output block.

    out_ref[0] <- sum(pred * target), out_ref[1] <- sum(pred),
    out_ref[2] <- sum(target), each kept lane/sublane-wide (reduced later).
    """
    c = pl.program_id(1)  # reduction-chunk axis (innermost, "arbitrary")

    @pl.when(c == 0)
    def _init():
        out_ref[...] = jnp.zeros_like(out_ref)

    p = pred_ref[...].astype(jnp.float32)    # (block_rows, 128)
    t = target_ref[...].astype(jnp.float32)  # (block_rows, 128)

    # Fold the row axis into groups of 8 sublanes and sum over the group axis:
    # pure VPU vreg adds, no cross-lane (XLU) work in the hot loop.
    shape3 = (block_rows // _SUBLANES, _SUBLANES, _LANES)
    out_ref[0] += jnp.sum((p * t).reshape(shape3), axis=0)
    out_ref[1] += jnp.sum(p.reshape(shape3), axis=0)
    out_ref[2] += jnp.sum(t.reshape(shape3), axis=0)


def _pick_block_rows(rows, target):
    """Largest multiple-of-8 row count <= target that evenly divides `rows`.

    `rows` is always a multiple of 8, so this terminates with a valid value.
    """
    if rows <= target:
        return rows
    r = max(_SUBLANES, (target // _SUBLANES) * _SUBLANES)
    while r >= _SUBLANES:
        if rows % r == 0:
            return r
        r -= _SUBLANES
    return _SUBLANES


def dice_loss(pred, target, eps=1e-6, target_block_rows=4096):
    """Pallas equivalent of DiceLoss.forward.

    pred, target: (B, H, W) arrays (any float dtype). Returns scalar float32.

    target_block_rows: rows (of 128 lanes) per grid step. 4096 -> 2 MiB f32
    per input block (8 MiB double-buffered VMEM), safe on v5e/v6e/v7x default
    scoped VMEM. On v6e (128 MiB VMEM) it can be raised to 8192+ for slightly
    fewer grid steps.
    """
    assert pred.shape == target.shape
    b = pred.shape[0]
    p = pred.reshape(b, -1)
    t = target.reshape(b, -1)
    n = p.shape[1]

    # Pad the flattened spatial axis to a multiple of 8*128 = 1024 so it maps
    # onto whole (8, 128) vregs. Zero padding is sum-neutral; for typical mask
    # sizes (H*W % 1024 == 0) this branch is not taken and no copy is emitted.
    n_pad = ((n + _UNIT - 1) // _UNIT) * _UNIT
    if n_pad != n:
        p = jnp.pad(p, ((0, 0), (0, n_pad - n)))
        t = jnp.pad(t, ((0, 0), (0, n_pad - n)))

    rows = n_pad // _LANES  # multiple of 8
    p = p.reshape(b, rows, _LANES)
    t = t.reshape(b, rows, _LANES)

    block_rows = _pick_block_rows(rows, target_block_rows)
    num_chunks = rows // block_rows

    partial = pl.pallas_call(
        functools.partial(_dice_partial_kernel, block_rows=block_rows),
        out_shape=jax.ShapeDtypeStruct((b, 3, _SUBLANES, _LANES), jnp.float32),
        grid_spec=pltpu.PrefetchScalarGridSpec(
            num_scalar_prefetch=0,
            grid=(b, num_chunks),
            in_specs=[
                pl.BlockSpec((None, block_rows, _LANES),
                             lambda i, c: (i, c, 0)),
                pl.BlockSpec((None, block_rows, _LANES),
                             lambda i, c: (i, c, 0)),
            ],
            # Same block index across the chunk axis -> output block stays
            # resident in VMEM and acts as the accumulator.
            out_specs=pl.BlockSpec((None, 3, _SUBLANES, _LANES),
                                   lambda i, c: (i, 0, 0, 0)),
        ),
        compiler_params=pltpu.CompilerParams(
            dimension_semantics=("parallel", "arbitrary")),
    )(p, t)

    # Tiny O(B) epilogue in plain JAX: cross-lane reduce + dice formula + mean.
    sums = jnp.sum(partial, axis=(2, 3))            # (B, 3)
    intersection = sums[:, 0]
    union = sums[:, 1] + sums[:, 2]
    dice_coeff = (2.0 * intersection + eps) / (union + eps)
    return 1.0 - jnp.mean(dice_coeff)


def dice_loss_ref(pred, target, eps=1e-6):
    """Pure-JAX reference mirroring the PyTorch module."""
    b = pred.shape[0]
    p = pred.reshape(b, -1).astype(jnp.float32)
    t = target.reshape(b, -1).astype(jnp.float32)
    intersection = jnp.sum(p * t, axis=1)
    union = jnp.sum(p, axis=1) + jnp.sum(t, axis=1)
    dice_coeff = (2.0 * intersection + eps) / (union + eps)
    return 1.0 - jnp.mean(dice_coeff)


if __name__ == "__main__":
    key = jax.random.PRNGKey(0)

    # 1) Small shape matching the module's docstring (B, H, W).
    k1, k2, k3, k4, k5, k6 = jax.random.split(key, 6)
    B, H, W = 2, 16, 16
    pred = jax.nn.sigmoid(jax.random.normal(k1, (B, H, W), dtype=jnp.float32))
    target = (jax.random.uniform(k2, (B, H, W)) > 0.5).astype(jnp.float32)
    loss = jax.block_until_ready(dice_loss(pred, target))
    ref = jax.block_until_ready(dice_loss_ref(pred, target))
    assert jnp.allclose(loss, ref, atol=1e-5, rtol=1e-5), (loss, ref)

    # 2) Non-multiple-of-1024 spatial size (exercises the sum-neutral pad path).
    pred2 = jax.nn.sigmoid(jax.random.normal(k3, (2, 24, 24), dtype=jnp.float32))
    target2 = (jax.random.uniform(k4, (2, 24, 24)) > 0.5).astype(jnp.float32)
    loss2 = jax.block_until_ready(dice_loss(pred2, target2))
    ref2 = jax.block_until_ready(dice_loss_ref(pred2, target2))
    assert jnp.allclose(loss2, ref2, atol=1e-5, rtol=1e-5), (loss2, ref2)

    # 3) Multi-chunk reduction path (small block_rows forces several grid
    #    steps along the reduction axis).
    pred3 = jax.nn.sigmoid(jax.random.normal(k5, (2, 64, 64), dtype=jnp.float32))
    target3 = (jax.random.uniform(k6, (2, 64, 64)) > 0.5).astype(jnp.float32)
    loss3 = jax.block_until_ready(dice_loss(pred3, target3, target_block_rows=8))
    ref3 = jax.block_until_ready(dice_loss_ref(pred3, target3))
    assert jnp.allclose(loss3, ref3, atol=1e-5, rtol=1e-5), (loss3, ref3)

    print("KERNEL_OK")
</pallas_src>

<mosaic_0001>
module attributes {stable_mosaic.version = 11 : i64} {
  func.func @_dice_partial_kernel(%arg0: i32, %arg1: i32, %arg2: memref<1x8x128xf32, #tpu.memory_space<vmem>>, %arg3: memref<1x8x128xf32, #tpu.memory_space<vmem>>, %arg4: memref<1x3x8x128xf32, #tpu.memory_space<vmem>>) attributes {dimension_semantics = [#tpu.dimension_semantics<parallel>, #tpu.dimension_semantics<arbitrary>], iteration_bounds = array<i64: 2, 1>, scalar_prefetch = 0 : i64, scratch_operands = 0 : i64, tpu.core_type = #tpu.core_type<tc>, window_params = [{transform_indices = @transform_0, window_bounds = array<i64: 1, 8, 128>}, {transform_indices = @transform_1, window_bounds = array<i64: 1, 8, 128>}, {transform_indices = @transform_2, window_bounds = array<i64: 1, 3, 8, 128>}]} {
    %c0_i32 = arith.constant 0 : i32
    %0 = arith.cmpi eq, %arg1, %c0_i32 : i32
    %1 = arith.extui %0 : i1 to i32
    %c0_i32_0 = arith.constant 0 : i32
    %2 = arith.cmpi ne, %1, %c0_i32_0 : i32
    scf.if %2 {
      %cst_30 = arith.constant 0.000000e+00 : f32
      %32 = vector.broadcast %cst_30 : f32 to vector<3x8x128xf32>
      %c0_31 = arith.constant 0 : index
      %c0_32 = arith.constant 0 : index
      %c0_33 = arith.constant 0 : index
      %c0_34 = arith.constant 0 : index
      %33 = vector.load %arg4[%c0_31, %c0_32, %c0_33, %c0_34] : memref<1x3x8x128xf32, #tpu.memory_space<vmem>>, vector<1x3x8x128xf32>
      %34 = vector.shape_cast %33 : vector<1x3x8x128xf32> to vector<3x8x128xf32>
      %35 = vector.shape_cast %32 : vector<3x8x128xf32> to vector<1x3x8x128xf32>
      tpu.vector_store %arg4[%c0_31, %c0_32, %c0_33, %c0_34], %35 {strides = array<i32>} : memref<1x3x8x128xf32, #tpu.memory_space<vmem>>, vector<1x3x8x128xf32>,
    } else {
    }
    %c0 = arith.constant 0 : index
    %c0_1 = arith.constant 0 : index
    %c0_2 = arith.constant 0 : index
    %3 = vector.load %arg2[%c0, %c0_1, %c0_2] : memref<1x8x128xf32, #tpu.memory_space<vmem>>, vector<1x8x128xf32>
    %4 = vector.shape_cast %3 : vector<1x8x128xf32> to vector<8x128xf32>
    %c0_3 = arith.constant 0 : index
    %c0_4 = arith.constant 0 : index
    %c0_5 = arith.constant 0 : index
    %5 = vector.load %arg3[%c0_3, %c0_4, %c0_5] : memref<1x8x128xf32, #tpu.memory_space<vmem>>, vector<1x8x128xf32>
    %6 = vector.shape_cast %5 : vector<1x8x128xf32> to vector<8x128xf32>
    %c0_6 = arith.constant 0 : index
    %c0_7 = arith.constant 0 : index
    %c0_8 = arith.constant 0 : index
    %c0_9 = arith.constant 0 : index
    %7 = vector.load %arg4[%c0_6, %c0_7, %c0_8, %c0_9] : memref<1x3x8x128xf32, #tpu.memory_space<vmem>>, vector<1x1x8x128xf32>
    %8 = vector.shape_cast %7 : vector<1x1x8x128xf32> to vector<8x128xf32>
    %9 = arith.mulf %4, %6 : vector<8x128xf32>
    %10 = vector.shape_cast %9 : vector<8x128xf32> to vector<1x8x128xf32>
    %cst = arith.constant dense<0.000000e+00> : vector<8x128xf32>
    %11 = vector.multi_reduction <add>, %10, %cst [0] : vector<1x8x128xf32> to vector<8x128xf32>
    %12 = arith.addf %8, %11 : vector<8x128xf32>
    %c0_10 = arith.constant 0 : index
    %c0_11 = arith.constant 0 : index
    %c0_12 = arith.constant 0 : index
    %c0_13 = arith.constant 0 : index
    %13 = vector.load %arg4[%c0_10, %c0_11, %c0_12, %c0_13] : memref<1x3x8x128xf32, #tpu.memory_space<vmem>>, vector<1x1x8x128xf32>
    %14 = vector.shape_cast %13 : vector<1x1x8x128xf32> to vector<8x128xf32>
    %15 = vector.shape_cast %12 : vector<8x128xf32> to vector<1x1x8x128xf32>
    tpu.vector_store %arg4[%c0_10, %c0_11, %c0_12, %c0_13], %15 {strides = array<i32>} : memref<1x3x8x128xf32, #tpu.memory_space<vmem>>, vector<1x1x8x128xf32>,
    %c0_14 = arith.constant 0 : index
    %c1 = arith.constant 1 : index
    %c0_15 = arith.constant 0 : index
    %c0_16 = arith.constant 0 : index
    %16 = vector.load %arg4[%c0_14, %c1, %c0_15, %c0_16] : memref<1x3x8x128xf32, #tpu.memory_space<vmem>>, vector<1x1x8x128xf32>
    %17 = vector.shape_cast %16 : vector<1x1x8x128xf32> to vector<8x128xf32>
    %18 = vector.shape_cast %4 : vector<8x128xf32> to vector<1x8x128xf32>
    %cst_17 = arith.constant dense<0.000000e+00> : vector<8x128xf32>
    %19 = vector.multi_reduction <add>, %18, %cst_17 [0] : vector<1x8x128xf32> to vector<8x128xf32>
    %20 = arith.addf %17, %19 : vector<8x128xf32>
    %c0_18 = arith.constant 0 : index
    %c1_19 = arith.constant 1 : index
    %c0_20 = arith.constant 0 : index
    %c0_21 = arith.constant 0 : index
    %21 = vector.load %arg4[%c0_18, %c1_19, %c0_20, %c0_21] : memref<1x3x8x128xf32, #tpu.memory_space<vmem>>, vector<1x1x8x128xf32>
    %22 = vector.shape_cast %21 : vector<1x1x8x128xf32> to vector<8x128xf32>
    %23 = vector.shape_cast %20 : vector<8x128xf32> to vector<1x1x8x128xf32>
    tpu.vector_store %arg4[%c0_18, %c1_19, %c0_20, %c0_21], %23 {strides = array<i32>} : memref<1x3x8x128xf32, #tpu.memory_space<vmem>>, vector<1x1x8x128xf32>,
    %c0_22 = arith.constant 0 : index
    %c2 = arith.constant 2 : index
    %c0_23 = arith.constant 0 : index
    %c0_24 = arith.constant 0 : index
    %24 = vector.load %arg4[%c0_22, %c2, %c0_23, %c0_24] : memref<1x3x8x128xf32, #tpu.memory_space<vmem>>, vector<1x1x8x128xf32>
    %25 = vector.shape_cast %24 : vector<1x1x8x128xf32> to vector<8x128xf32>
    %26 = vector.shape_cast %6 : vector<8x128xf32> to vector<1x8x128xf32>
    %cst_25 = arith.constant dense<0.000000e+00> : vector<8x128xf32>
    %27 = vector.multi_reduction <add>, %26, %cst_25 [0] : vector<1x8x128xf32> to vector<8x128xf32>
    %28 = arith.addf %25, %27 : vector<8x128xf32>
    %c0_26 = arith.constant 0 : index
    %c2_27 = arith.constant 2 : index
    %c0_28 = arith.constant 0 : index
    %c0_29 = arith.constant 0 : index
    %29 = vector.load %arg4[%c0_26, %c2_27, %c0_28, %c0_29] : memref<1x3x8x128xf32, #tpu.memory_space<vmem>>, vector<1x1x8x128xf32>
    %30 = vector.shape_cast %29 : vector<1x1x8x128xf32> to vector<8x128xf32>
    %31 = vector.shape_cast %28 : vector<8x128xf32> to vector<1x1x8x128xf32>
    tpu.vector_store %arg4[%c0_26, %c2_27, %c0_28, %c0_29], %31 {strides = array<i32>} : memref<1x3x8x128xf32, #tpu.memory_space<vmem>>, vector<1x1x8x128xf32>,
    return
  }
  func.func @transform_0(%arg0: i32, %arg1: i32) -> (i32, i32, i32) {
    %c0_i32 = arith.constant 0 : i32
    %c0_i32_0 = arith.constant 0 : i32
    return %arg0, %arg1, %c0_i32 : i32, i32, i32
  }
  func.func @transform_1(%arg0: i32, %arg1: i32) -> (i32, i32, i32) {
    %c0_i32 = arith.constant 0 : i32
    %c0_i32_0 = arith.constant 0 : i32
    return %arg0, %arg1, %c0_i32 : i32, i32, i32
  }
  func.func @transform_2(%arg0: i32, %arg1: i32) -> (i32, i32, i32, i32) {
    %c0_i32 = arith.constant 0 : i32
    %c0_i32_0 = arith.constant 0 : i32
    %c0_i32_1 = arith.constant 0 : i32
    %c0_i32_2 = arith.constant 0 : i32
    return %arg0, %c0_i32, %c0_i32_0, %c0_i32_1 : i32, i32, i32, i32
  }
}

</mosaic_0001>

<llo_original>
// kernel: tpu_custom_call.1
$region0: #{tpu_custom_call.1}
  #allocation0 [shape = 'u32[]', space=smem, size = 0x4, offset = 0x4, fixed_abs, tag = 'smem constant byte address 0x4 - core index']
  #allocation1 [shape = 'u32[144,128]{1,0:T(1,128)}', space=vmem, size = 0x12000, scoped, tag = 'internal scratch']
  %s0 = inlined_call_operand.hbm [shape: f32[2,8,128], index: 0, kind: input, shape index: {}]
  %s1 = inlined_call_operand.hbm [shape: f32[2,8,128], index: 1, kind: input, shape index: {}]
  %s2 = inlined_call_operand.hbm [shape: f32[2,3,8,128], index: 2, kind: output, shape index: {}]
  %s3 = sld [smem:[#allocation0]]
  $region53: #{tpu_custom_call.1} parent=0
    _
  %s5 = ssub.s32 1, %s3
  %s6 = scalar_select 0, %s5, %s3
  $region1: #{tpu_custom_call.1} parent=0
    #allocation2 [shape = 'u8[8192]{0}', space=vmem, size = 0x2000, scoped, tag = 'input window, operand 0']
    #allocation3 [shape = 's32[2]{0}', space=sflag, size = 0x8, scoped, tag = 'scoped memory for tpu_custom_call.1']
    #allocation4 [shape = 's32[2]{0}', space=sflag, size = 0x8, scoped, tag = 'scoped memory for tpu_custom_call.1']
    #allocation5 [shape = 'u8[8192]{0}', space=vmem, size = 0x2000, scoped, tag = 'input window, operand 1']
    #allocation6 [shape = 's32[2]{0}', space=sflag, size = 0x8, scoped, tag = 'scoped memory for tpu_custom_call.1']
    #allocation7 [shape = 'u8[24576]{0}', space=vmem, size = 0x6000, scoped, tag = 'output window, operand 0']
    %7 = vsyncpa [#allocation3], 0
    %s8 = scalar_lea.sflag [#allocation3], 1
    %9 = vsyncpa %s8, 0
    %10 = vsyncpa [#allocation6], 0
    %s11 = scalar_lea.sflag [#allocation6], 1
    %12 = vsyncpa %s11, 0
    %13 = vsyncpa [#allocation4], 0
    %s14 = scalar_lea.sflag [#allocation4], 1
    %15 = vsyncpa %s14, 0
    loop: start=0, step=1, limit=4
    $region2: #{tpu_custom_call.1} parent=1 // loop_pre_header
      _
    $region3: #{tpu_custom_call.1} parent=1 // loop_header
      %s17 = sphi 0, %s21
      %p18 = scmp.ge.s32.totalorder %s17, 4
      %s24 = sphi 0, %s36
      %s25 = sphi 0, %s32
      %s26 = sphi 0, %s24
      %s27 = sphi 0, %s25
      %s28 = sphi 0, %s26
      %s29 = sphi 0, %s27
      %s41 = sphi 0, %s43
      %s44 = sphi 0, %s41
      %s45 = sphi 0, %s44
      %s61 = sphi 0, %s45
      %s69 = sphi 0, %s71
      %s72 = sphi 0, %s69
      %s73 = sphi 0, %s72
      %s89 = sphi 0, %s73
      %s95 = sphi 0, %s97
      %s98 = sphi 0, %s95
      %s99 = sphi 0, %s98
      %s115 = sphi 0, %s99
    $region4: #{tpu_custom_call.1} parent=1 // loop_header_branch
      %20 = sbr.rel (%p18) target = $region8
    $region5: #{tpu_custom_call.1} parent=1 // loop_body
      %s22 = ssub.s32 %s17, 1
      %s23 = ssub.s32 %s17, 2
      %s30 = sadd.s32 1, %s25
      %p31 = scmp.ge.s32.totalorder %s30, 1
      %s32 = scalar_select %p31, 0, %s30
      %s33 = sadd.s32 1, %s24
      %s34 = scalar_select %p31, %s33, %s24
      %p35 = scmp.ge.s32.totalorder %s34, 2
      %s36 = scalar_select %p35, 0, %s34
      %s37 = ssub.s32 %s24, %s36
      %s38 = ssub.s32 %s25, %s32
      %s39 = sor.u32 %s37, %s38
      %p40 = scmp.eq.s32.totalorder %s39, 0
      %s42 = sadd.s32 %s41, 1
      %s43 = scalar_select %p40, %s41, %s42
      %p46 = pneg %p40
      %p47 = scmp.eq.s32.totalorder %s17, 1
      %p48 = por %p46, %p47
      %p49 = scmp.ne.s32.totalorder %s41, %s44
      %p50 = scmp.eq.s32.totalorder %s17, 0
      %p51 = por %p49, %p50
      %p52 = scmp.ne.s32.totalorder %s41, %s44
      %p53 = scmp.eq.s32.totalorder %s22, 1
      %p54 = por %p52, %p53
      %p55 = scmp.ne.s32.totalorder %s44, %s45
      %p56 = scmp.eq.s32.totalorder %s22, 0
      %p57 = por %p55, %p56
      %p58 = scmp.ne.s32.totalorder %s44, %s45
      %p59 = scmp.eq.s32.totalorder %s23, 1
      %p60 = por %p58, %p59
      %p62 = scmp.ne.s32.totalorder %s45, %s61
      %p63 = scmp.eq.s32.totalorder %s23, 0
      %p64 = por %p62, %p63
      %s65 = ssub.s32 %s24, %s36
      %s66 = ssub.s32 %s25, %s32
      %s67 = sor.u32 %s65, %s66
      %p68 = scmp.eq.s32.totalorder %s67, 0
      %s70 = sadd.s32 %s69, 1
      %s71 = scalar_select %p68, %s69, %s70
      %p74 = pneg %p68
      %p75 = scmp.eq.s32.totalorder %s17, 1
      %p76 = por %p74, %p75
      %p77 = scmp.ne.s32.totalorder %s69, %s72
      %p78 = scmp.eq.s32.totalorder %s17, 0
      %p79 = por %p77, %p78
      %p80 = scmp.ne.s32.totalorder %s69, %s72
      %p81 = scmp.eq.s32.totalorder %s22, 1
      %p82 = por %p80, %p81
      %p83 = scmp.ne.s32.totalorder %s72, %s73
      %p84 = scmp.eq.s32.totalorder %s22, 0
      %p85 = por %p83, %p84
      %p86 = scmp.ne.s32.totalorder %s72, %s73
      %p87 = scmp.eq.s32.totalorder %s23, 1
      %p88 = por %p86, %p87
      %p90 = scmp.ne.s32.totalorder %s73, %s89
      %p91 = scmp.eq.s32.totalorder %s23, 0
      %p92 = por %p90, %p91
      %s93 = ssub.s32 %s24, %s36
      %p94 = scmp.eq.s32.totalorder %s93, 0
      %s96 = sadd.s32 %s95, 1
      %s97 = scalar_select %p94, %s95, %s96
      %p100 = pneg %p94
      %p101 = scmp.eq.s32.totalorder %s17, 1
      %p102 = por %p100, %p101
      %p103 = scmp.ne.s32.totalorder %s95, %s98
      %p104 = scmp.eq.s32.totalorder %s17, 0
      %p105 = por %p103, %p104
      %p106 = scmp.ne.s32.totalorder %s95, %s98
      %p107 = scmp.eq.s32.totalorder %s22, 1
      %p108 = por %p106, %p107
      %p109 = scmp.ne.s32.totalorder %s98, %s99
      %p110 = scmp.eq.s32.totalorder %s22, 0
      %p111 = por %p109, %p110
      %p112 = scmp.ne.s32.totalorder %s98, %s99
      %p113 = scmp.eq.s32.totalorder %s23, 1
      %p114 = por %p112, %p113
      %p116 = scmp.ne.s32.totalorder %s99, %s115
      %p117 = scmp.eq.s32.totalorder %s23, 0
      %p118 = por %p116, %p117
      %p119 = scmp.le.s32.totalorder 1, %s17
      %p120 = scmp.lt.s32.totalorder %s17, 3
      %p121 = pnand %p119, %p120
      %p122 = pneg %p121
      // Predicated region
      $region9: #{tpu_custom_call.1} parent=5 // pred_check
        _
      $region10: #{tpu_custom_call.1} parent=5 // pred_check_branch
        %124 = sbr.rel (%p121) target = $region12
      $region11: #{tpu_custom_call.1} parent=5 // pred_region
        %s125 = ssub.s32 %s17, 1
      $region12: #{tpu_custom_call.1} parent=5 // pred_fallthru
        _
      %p126 = scmp.lt.s32.totalorder %s17, 2
      // Predicated region
      $region13: #{tpu_custom_call.1} parent=5 // pred_check
        %p127 = pneg %p126
      $region14: #{tpu_custom_call.1} parent=5 // pred_check_branch
        %129 = sbr.rel (%p127) target = $region16
      $region15: #{tpu_custom_call.1} parent=5 // pred_region
        // Predicated region
        $region17: #{tpu_custom_call.1} parent=15 // pred_check
          %p130 = pneg %p51
        $region18: #{tpu_custom_call.1} parent=15 // pred_check_branch
          %132 = sbr.rel (%p130) target = $region20
        $region19: #{tpu_custom_call.1} parent=15 // pred_region
          %s133 = sand.u32 %s41, 1
          %s134 = scalar_lea.sflag [#allocation3], %s133
          %s135 = sand.u32 %s41, 1
          %s136 = smul.addr %s135, 8
          %s137 = scalar_lea.vmem [#allocation2], %s136
          %s139 = ssub.s32 128, 128
          %140 = vsyncadd %s134, %s139
          %s141 = sadd.s32 %s25, %s24
          %s142 = smul.addr %s141, 128
          %s143 = scalar_lea.hbm %s0, %s142
          %s145 = sshll.u32 %s137, 4
          %s146 = int_to_ptr.vmem [resolvable:$true] %s145
          %148 = dma.hbm_to_vmem [thread:$0]  %s143, 128, %s146, %s134
        $region20: #{tpu_custom_call.1} parent=15 // pred_fallthru
          _
        // Predicated region
        $region21: #{tpu_custom_call.1} parent=15 // pred_check
          %p149 = pneg %p79
        $region22: #{tpu_custom_call.1} parent=15 // pred_check_branch
          %151 = sbr.rel (%p149) target = $region24
        $region23: #{tpu_custom_call.1} parent=15 // pred_region
          %s152 = sand.u32 %s69, 1
          %s153 = scalar_lea.sflag [#allocation6], %s152
          %s154 = sand.u32 %s69, 1
          %s155 = smul.addr %s154, 8
          %s156 = scalar_lea.vmem [#allocation5], %s155
          %s158 = ssub.s32 128, 128
          %159 = vsyncadd %s153, %s158
          %s160 = sadd.s32 %s25, %s24
          %s161 = smul.addr %s160, 128
          %s162 = scalar_lea.hbm %s1, %s161
          %s164 = sshll.u32 %s156, 4
          %s165 = int_to_ptr.vmem [resolvable:$true] %s164
          %167 = dma.hbm_to_vmem [thread:$0]  %s162, 128, %s165, %s153
        $region24: #{tpu_custom_call.1} parent=15 // pred_fallthru
          _
      $region16: #{tpu_custom_call.1} parent=5 // pred_fallthru
        _
      %p168 = scmp.le.s32.totalorder 1, %s17
      %p169 = scmp.lt.s32.totalorder %s17, 3
      %p170 = pnand %p168, %p169
      %p171 = pneg %p170
      // Predicated region
      $region25: #{tpu_custom_call.1} parent=5 // pred_check
        _
      $region26: #{tpu_custom_call.1} parent=5 // pred_check_branch
        %173 = sbr.rel (%p170) target = $region28
      $region27: #{tpu_custom_call.1} parent=5 // pred_region
        %s174 = ssub.s32 %s17, 1
        %s175 = sand.u32 %s44, 1
        %s176 = scalar_lea.sflag [#allocation3], %s175
        %s177 = sand.u32 %s44, 1
        %s178 = smul.addr %s177, 8
        %s179 = scalar_lea.vmem [#allocation2], %s178
        // Predicated region
        $region29: #{tpu_custom_call.1} parent=27 // pred_check
          %p180 = pneg %p57
        $region30: #{tpu_custom_call.1} parent=27 // pred_check_branch
          %182 = sbr.rel (%p180) target = $region32
        $region31: #{tpu_custom_call.1} parent=27 // pred_region
          %183 = dma.done %s176, 128
        $region32: #{tpu_custom_call.1} parent=27 // pred_fallthru
          _
        %s184 = sand.u32 %s72, 1
        %s185 = scalar_lea.sflag [#allocation6], %s184
        %s186 = sand.u32 %s72, 1
        %s187 = smul.addr %s186, 8
        %s188 = scalar_lea.vmem [#allocation5], %s187
        // Predicated region
        $region33: #{tpu_custom_call.1} parent=27 // pred_check
          %p189 = pneg %p85
        $region34: #{tpu_custom_call.1} parent=27 // pred_check_branch
          %191 = sbr.rel (%p189) target = $region36
        $region35: #{tpu_custom_call.1} parent=27 // pred_region
          %192 = dma.done %s185, 128
        $region36: #{tpu_custom_call.1} parent=27 // pred_fallthru
          _
        %s193 = sand.u32 %s44, 1
        %s194 = scalar_lea.sflag [#allocation3], %s193
        %s195 = sand.u32 %s44, 1
        %s196 = smul.addr %s195, 8
        %s197 = scalar_lea.vmem [#allocation2], %s196
        %p198 = pneg %p57
        %p199 = pneg %p54
        %s200 = sand.u32 %s72, 1
        %s201 = scalar_lea.sflag [#allocation6], %s200
        %s202 = sand.u32 %s72, 1
        %s203 = smul.addr %s202, 8
        %s204 = scalar_lea.vmem [#allocation5], %s203
        %p205 = pneg %p85
        %p206 = pneg %p82
        %p207 = pneg %p111
        %p208 = pneg %p108
        %s209 = sand.u32 %s98, 1
        %s210 = scalar_lea.sflag [#allocation4], %s209
        %s211 = sand.u32 %s98, 1
        %s212 = smul.addr %s211, 24
        %s213 = scalar_lea.vmem [#allocation7], %s212
        %p214 = scmp.eq.s32.totalorder %s27, 0
        // Predicated region
        $region37: #{tpu_custom_call.1} parent=27 // pred_check
          %p215 = pneg %p214
        $region38: #{tpu_custom_call.1} parent=27 // pred_check_branch
          %217 = sbr.rel (%p215) target = $region40
        $region39: #{tpu_custom_call.1} parent=27 // pred_region
          %218 = vst [vmem:[%s213] sm:$0xff] 0.0
          %219 = vst [vmem:[%s213 + $0x8] sm:$0xff] 0.0
          %220 = vst [vmem:[%s213 + $0x10] sm:$0xff] 0.0
        $region40: #{tpu_custom_call.1} parent=27 // pred_fallthru
          _
        %v221 = vld [vmem:[%s179] sm:$0xff]
        %v222 = vld [vmem:[%s188] sm:$0xff]
        %v223 = vld [vmem:[%s213] sm:$0xff]
        %v224 = vmul.f32 %v221, %v222
        %v225 = vadd.f32 %v224, 0.0
        %v226 = vadd.f32 %v223, %v225
        %227 = vst [vmem:[%s213] sm:$0xff] %v226
        %s228 = scalar_lea.vmem %s213, 8 [#allocation7]
        %v229 = vld [vmem:[%s228] sm:$0xff]
        %v230 = vadd.f32 %v221, 0.0
        %v231 = vadd.f32 %v229, %v230
        %232 = vst [vmem:[%s228] sm:$0xff] %v231
        %s233 = scalar_lea.vmem %s213, 16 [#allocation7]
        %v234 = vld [vmem:[%s233] sm:$0xff]
        %v235 = vadd.f32 %v222, 0.0
        %v236 = vadd.f32 %v234, %v235
        %237 = vst [vmem:[%s233] sm:$0xff] %v236
        %s238 = sand.u32 %s98, 1
        %s239 = scalar_lea.sflag [#allocation4], %s238
        %s240 = sand.u32 %s98, 1
        %s241 = smul.addr %s240, 24
        %s242 = scalar_lea.vmem [#allocation7], %s241
        // Predicated region
        $region41: #{tpu_custom_call.1} parent=27 // pred_check
          %p243 = pneg %p108
        $region42: #{tpu_custom_call.1} parent=27 // pred_check_branch
          %245 = sbr.rel (%p243) target = $region44
        $region43: #{tpu_custom_call.1} parent=27 // pred_region
          %s247 = ssub.s32 384, 384
          %248 = vsyncadd %s239, %s247
          %s249 = smul.addr %s26, 3
          %s250 = smul.addr %s249, 128
          %s251 = scalar_lea.hbm %s2, %s250
          %s252 = sshll.u32 %s242, 4
          %s253 = int_to_ptr.vmem [resolvable:$true] %s252
          %258 = dma.vmem_to_hbm [thread:$0]  %s253, 384, %s251, %s239, 128, 128, 8
        $region44: #{tpu_custom_call.1} parent=27 // pred_fallthru
          _
      $region28: #{tpu_custom_call.1} parent=5 // pred_fallthru
        _
      %p259 = scmp.le.s32.totalorder 2, %s17
      // Predicated region
      $region45: #{tpu_custom_call.1} parent=5 // pred_check
        %p260 = pneg %p259
      $region46: #{tpu_custom_call.1} parent=5 // pred_check_branch
        %262 = sbr.rel (%p260) target = $region48
      $region47: #{tpu_custom_call.1} parent=5 // pred_region
        %s263 = ssub.s32 %s17, 2
        // Predicated region
        $region49: #{tpu_custom_call.1} parent=47 // pred_check
          %p264 = pneg %p114
        $region50: #{tpu_custom_call.1} parent=47 // pred_check_branch
          %266 = sbr.rel (%p264) target = $region52
        $region51: #{tpu_custom_call.1} parent=47 // pred_region
          %s267 = sand.u32 %s99, 1
          %s268 = scalar_lea.sflag [#allocation4], %s267
          %s269 = sand.u32 %s99, 1
          %s270 = smul.addr %s269, 24
          %s271 = scalar_lea.vmem [#allocation7], %s270
          %272 = dma.done %s268, 384
        $region52: #{tpu_custom_call.1} parent=47 // pred_fallthru
          _
      $region48: #{tpu_custom_call.1} parent=5 // pred_fallthru
        _
    $region6: #{tpu_custom_call.1} parent=1 // loop_footer
      %s21 = sadd.s32 1, %s17
    $region7: #{tpu_custom_call.1} parent=1 // loop_footer_branch
      %16 = sbr.rel target = $region3
    $region8: #{tpu_custom_call.1} parent=1 // loop_exit
      _
    %273 = vsyncpa [#allocation3], 1
    %s274 = scalar_lea.sflag [#allocation3], 1
    %275 = vsyncpa %s274, 1
    %276 = vsyncpa [#allocation6], 1
    %s277 = scalar_lea.sflag [#allocation6], 1
    %278 = vsyncpa %s277, 1
    %279 = vsyncpa [#allocation4], 1
    %s280 = scalar_lea.sflag [#allocation4], 1
    %281 = vsyncpa %s280, 1

</llo_original>
